<compile_context>
chip_gen: v7x
topology: tpu7x:2x2x1
jax: 0.10.0
libtpu: 0.0.40
codegen_flags: <defaults>
</compile_context>

<pallas_src>
import jax
import jax.numpy as jnp
from jax.experimental import pallas as pl
from jax.experimental.pallas import tpu as pltpu

_LANES = 128
_TARGET_BLOCK_BYTES = 4 * 1024 * 1024      # 4 MiB per input block
_VMEM_LIMIT_BYTES = 48 * 1024 * 1024       # 24 MiB double-buffered footprint + headroom


def _min_sublanes(dtype) -> int:
    """Native sublane multiple for this dtype (8 for f32, 16 for bf16, 32 for int8/fp8)."""
    itemsize = jnp.dtype(dtype).itemsize
    return max(8, 8 * (4 // max(itemsize, 1)))


def _round_up(x: int, m: int) -> int:
    return ((x + m - 1) // m) * m


def _ddpg_loss_kernel(neg_k_ref, pi_ref, r_ref, out_ref):
    # neg_k lives in SMEM; elementwise chain runs on the VPU in f32.
    neg_k = neg_k_ref[0, 0]
    pi = pi_ref[...].astype(jnp.float32)
    r = r_ref[...].astype(jnp.float32)
    out_ref[...] = (neg_k * pi * r).astype(out_ref.dtype)


def ddpg_loss(pi: jax.Array,
              rewardi: jax.Array,
              k=50.0,
              *,
              min_pallas_bytes: int = 512 * 1024) -> jax.Array:
    assert pi.shape == rewardi.shape, "pi and rewardi must have identical shapes"
    orig_shape = pi.shape
    dtype = pi.dtype
    itemsize = jnp.dtype(dtype).itemsize
    n = pi.size

    neg_k = (-jnp.asarray(k, dtype=jnp.float32)).reshape(1, 1)

    # Tiny tensors: plain JAX (launch overhead dominates; XLA fuses this).
    # Same f32 compute path as the kernel so results match bit-for-bit.
    if n * itemsize < min_pallas_bytes:
        out = neg_k[0, 0] * pi.astype(jnp.float32) * rewardi.astype(jnp.float32)
        return out.astype(dtype)

    pi_flat = pi.reshape(-1)
    r_flat = rewardi.reshape(-1)

    # Ragged fallback only: pad the tail up to the next multiple of 128 lanes.
    padded = n % _LANES != 0
    if padded:
        n_pad = _round_up(n, _LANES)
        pi_flat = jnp.pad(pi_flat, (0, n_pad - n))
        r_flat = jnp.pad(r_flat, (0, n_pad - n))
    else:
        n_pad = n

    rows = n_pad // _LANES
    pi2d = pi_flat.reshape(rows, _LANES)     # zero-copy (contiguous reshape)
    r2d = r_flat.reshape(rows, _LANES)

    sublanes = _min_sublanes(dtype)
    max_block_rows = _TARGET_BLOCK_BYTES // (_LANES * itemsize)   # multiple of `sublanes`

    if rows <= sublanes:
        # Full-array block (legal even when rows is not sublane-aligned).
        block_rows = rows
    else:
        # Split into >= 2 steps so "parallel" grid sharding uses both TCs on
        # v7x; cap at the 4 MiB target block.
        half = _round_up(-(-rows // 2), sublanes)
        block_rows = min(max_block_rows, half)

    grid = (pl.cdiv(rows, block_rows),)      # partial last block is masked by Pallas

    out2d = pl.pallas_call(
        _ddpg_loss_kernel,
        out_shape=jax.ShapeDtypeStruct((rows, _LANES), dtype),
        grid=grid,
        in_specs=[
            pl.BlockSpec(memory_space=pltpu.MemorySpace.SMEM),          # neg_k scalar
            pl.BlockSpec((block_rows, _LANES), lambda i: (i, 0)),       # pi
            pl.BlockSpec((block_rows, _LANES), lambda i: (i, 0)),       # rewardi
        ],
        out_specs=pl.BlockSpec((block_rows, _LANES), lambda i: (i, 0)),
        compiler_params=pltpu.CompilerParams(
            dimension_semantics=("parallel",),
            vmem_limit_bytes=_VMEM_LIMIT_BYTES,
        ),
        cost_estimate=pl.CostEstimate(
            flops=2 * n,
            transcendentals=0,
            bytes_accessed=3 * n * itemsize,
        ),
    )(neg_k, pi2d, r2d)

    if padded:
        return out2d.reshape(-1)[:n].reshape(orig_shape)
    return out2d.reshape(orig_shape)


if __name__ == "__main__":
    key = jax.random.PRNGKey(0)
    k1, k2 = jax.random.split(key)

    # Small shapes consistent with the module (batch=2, channels=4, 16x16).
    pi = jax.random.normal(k1, (2, 4, 16, 16), dtype=jnp.float32)
    rewardi = jax.random.normal(k2, (2, 4, 16, 16), dtype=jnp.float32)

    # Force the Pallas path so the kernel actually runs at this small size.
    out = ddpg_loss(pi, rewardi, k=50.0, min_pallas_bytes=0)
    jax.block_until_ready(out)

    ref = -50.0 * pi * rewardi
    assert out.shape == pi.shape
    assert jnp.allclose(out, ref, atol=1e-6, rtol=1e-6)

    # Also sanity-check the small-tensor fast path (plain JAX dispatch).
    out_fast = ddpg_loss(pi, rewardi, k=50.0)
    jax.block_until_ready(out_fast)
    assert jnp.allclose(out_fast, ref, atol=1e-6, rtol=1e-6)

    print("KERNEL_OK")
</pallas_src>

<mosaic_0001>
module attributes {stable_mosaic.version = 11 : i64} {
  func.func @_ddpg_loss_kernel(%arg0: i32, %arg1: memref<1x1xf32, #tpu.memory_space<smem>>, %arg2: memref<8x128xf32, #tpu.memory_space<vmem>>, %arg3: memref<8x128xf32, #tpu.memory_space<vmem>>, %arg4: memref<8x128xf32, #tpu.memory_space<vmem>>) attributes {dimension_semantics = [#tpu.dimension_semantics<parallel>], iteration_bounds = array<i64: 2>, scalar_prefetch = 0 : i64, scratch_operands = 0 : i64, tpu.core_type = #tpu.core_type<tc>, window_params = [{transform_indices = @transform_0, window_bounds = array<i64: 1, 1>}, {transform_indices = @transform_1, window_bounds = array<i64: 8, 128>}, {transform_indices = @transform_2, window_bounds = array<i64: 8, 128>}, {transform_indices = @transform_3, window_bounds = array<i64: 8, 128>}]} {
    %c0 = arith.constant 0 : index
    %c0_0 = arith.constant 0 : index
    %0 = memref.load %arg1[%c0, %c0_0] : memref<1x1xf32, #tpu.memory_space<smem>>
    %c0_1 = arith.constant 0 : index
    %c0_2 = arith.constant 0 : index
    %1 = vector.load %arg2[%c0_1, %c0_2] : memref<8x128xf32, #tpu.memory_space<vmem>>, vector<8x128xf32>
    %c0_3 = arith.constant 0 : index
    %c0_4 = arith.constant 0 : index
    %2 = vector.load %arg3[%c0_3, %c0_4] : memref<8x128xf32, #tpu.memory_space<vmem>>, vector<8x128xf32>
    %3 = vector.broadcast %0 : f32 to vector<8x128xf32>
    %4 = arith.mulf %3, %1 : vector<8x128xf32>
    %5 = arith.mulf %4, %2 : vector<8x128xf32>
    %c0_5 = arith.constant 0 : index
    %c0_6 = arith.constant 0 : index
    %6 = vector.load %arg4[%c0_5, %c0_6] : memref<8x128xf32, #tpu.memory_space<vmem>>, vector<8x128xf32>
    tpu.vector_store %arg4[%c0_5, %c0_6], %5 {strides = array<i32>} : memref<8x128xf32, #tpu.memory_space<vmem>>, vector<8x128xf32>,
    return
  }
  func.func @transform_0(%arg0: i32) -> (i32, i32) {
    %c0_i32 = arith.constant 0 : i32
    %c0_i32_0 = arith.constant 0 : i32
    %c0_i32_1 = arith.constant 0 : i32
    return %c0_i32, %c0_i32_0 : i32, i32
  }
  func.func @transform_1(%arg0: i32) -> (i32, i32) {
    %c0_i32 = arith.constant 0 : i32
    %c0_i32_0 = arith.constant 0 : i32
    return %arg0, %c0_i32 : i32, i32
  }
  func.func @transform_2(%arg0: i32) -> (i32, i32) {
    %c0_i32 = arith.constant 0 : i32
    %c0_i32_0 = arith.constant 0 : i32
    return %arg0, %c0_i32 : i32, i32
  }
  func.func @transform_3(%arg0: i32) -> (i32, i32) {
    %c0_i32 = arith.constant 0 : i32
    %c0_i32_0 = arith.constant 0 : i32
    return %arg0, %c0_i32 : i32, i32
  }
}

</mosaic_0001>

<llo_original>
// kernel: tpu_custom_call.1
$region0: #{tpu_custom_call.1}
  #allocation0 [shape = 'u32[]', space=smem, size = 0x4, offset = 0x4, fixed_abs, tag = 'smem constant byte address 0x4 - core index']
  #allocation1 [shape = 'u32[144,128]{1,0:T(1,128)}', space=vmem, size = 0x12000, scoped, tag = 'internal scratch']
  #allocation2 [shape = 'f32[1,1]{1,0:T(1,128)S(6)}', space=smem, size = 0x200, scoped, tag = 'scoped memory for tpu_custom_call.1']
  %s0 = inlined_call_operand.<no memory space> [shape: f32[1,1], index: 0, kind: input, shape index: {}]
  %s1 = inlined_call_operand.hbm [shape: f32[16,128], index: 1, kind: input, shape index: {}]
  %s2 = inlined_call_operand.hbm [shape: f32[16,128], index: 2, kind: input, shape index: {}]
  %s3 = inlined_call_operand.hbm [shape: f32[16,128], index: 3, kind: output, shape index: {}]
  %s4 = sld [smem:[#allocation0]]
  $region53: #{tpu_custom_call.1} parent=0
    _
  %s6 = ssub.s32 1, %s4
  %s7 = scalar_select 0, %s6, %s4
  %8 = sst [smem:[#allocation2]] %s0
  $region1: #{tpu_custom_call.1} parent=0
    #allocation3 [shape = 'u8[8192]{0}', space=vmem, size = 0x2000, scoped, tag = 'input window, operand 1']
    #allocation4 [shape = 's32[2]{0}', space=sflag, size = 0x8, scoped, tag = 'scoped memory for tpu_custom_call.1']
    #allocation5 [shape = 's32[2]{0}', space=sflag, size = 0x8, scoped, tag = 'scoped memory for tpu_custom_call.1']
    #allocation6 [shape = 'u8[8192]{0}', space=vmem, size = 0x2000, scoped, tag = 'input window, operand 2']
    #allocation7 [shape = 's32[2]{0}', space=sflag, size = 0x8, scoped, tag = 'scoped memory for tpu_custom_call.1']
    #allocation8 [shape = 'u8[8192]{0}', space=vmem, size = 0x2000, scoped, tag = 'output window, operand 0']
    %9 = vsyncpa [#allocation4], 0
    %s10 = scalar_lea.sflag [#allocation4], 1
    %11 = vsyncpa %s10, 0
    %12 = vsyncpa [#allocation7], 0
    %s13 = scalar_lea.sflag [#allocation7], 1
    %14 = vsyncpa %s13, 0
    %15 = vsyncpa [#allocation5], 0
    %s16 = scalar_lea.sflag [#allocation5], 1
    %17 = vsyncpa %s16, 0
    loop: start=0, step=1, limit=4
    $region2: #{tpu_custom_call.1} parent=1 // loop_pre_header
      _
    $region3: #{tpu_custom_call.1} parent=1 // loop_header
      %s19 = sphi 0, %s23
      %p20 = scmp.ge.s32.totalorder %s19, 4
      %s27 = sphi 0, %s27
      %s29 = sphi 0, %s27
      %s30 = sphi 0, %s29
      %s44 = sphi 0, %s30
      %s50 = sphi 0, %s52
      %s53 = sphi 0, %s50
      %s54 = sphi 0, %s53
      %s70 = sphi 0, %s54
      %s76 = sphi 0, %s78
      %s79 = sphi 0, %s76
      %s80 = sphi 0, %s79
      %s96 = sphi 0, %s80
      %s102 = sphi 0, %s104
      %s105 = sphi 0, %s102
      %s106 = sphi 0, %s105
      %s122 = sphi 0, %s106
    $region4: #{tpu_custom_call.1} parent=1 // loop_header_branch
      %22 = sbr.rel (%p20) target = $region8
    $region5: #{tpu_custom_call.1} parent=1 // loop_body
      %s24 = ssub.s32 %s19, 1
      %s25 = ssub.s32 %s19, 2
      %s26 = sadd.s32 %s19, 1
      %s28 = sadd.s32 %s27, 1
      %p31 = scmp.eq.s32.totalorder %s19, 1
      %p32 = scmp.ne.s32.totalorder %s27, %s29
      %p33 = scmp.eq.s32.totalorder %s19, 0
      %p34 = por %p32, %p33
      %p35 = scmp.ne.s32.totalorder %s27, %s29
      %p36 = scmp.eq.s32.totalorder %s24, 1
      %p37 = por %p35, %p36
      %p38 = scmp.ne.s32.totalorder %s29, %s30
      %p39 = scmp.eq.s32.totalorder %s24, 0
      %p40 = por %p38, %p39
      %p41 = scmp.ne.s32.totalorder %s29, %s30
      %p42 = scmp.eq.s32.totalorder %s25, 1
      %p43 = por %p41, %p42
      %p45 = scmp.ne.s32.totalorder %s30, %s44
      %p46 = scmp.eq.s32.totalorder %s25, 0
      %p47 = por %p45, %p46
      %s48 = ssub.s32 %s19, %s26
      %p49 = scmp.eq.s32.totalorder %s48, 0
      %s51 = sadd.s32 %s50, 1
      %s52 = scalar_select %p49, %s50, %s51
      %p55 = pneg %p49
      %p56 = scmp.eq.s32.totalorder %s19, 1
      %p57 = por %p55, %p56
      %p58 = scmp.ne.s32.totalorder %s50, %s53
      %p59 = scmp.eq.s32.totalorder %s19, 0
      %p60 = por %p58, %p59
      %p61 = scmp.ne.s32.totalorder %s50, %s53
      %p62 = scmp.eq.s32.totalorder %s24, 1
      %p63 = por %p61, %p62
      %p64 = scmp.ne.s32.totalorder %s53, %s54
      %p65 = scmp.eq.s32.totalorder %s24, 0
      %p66 = por %p64, %p65
      %p67 = scmp.ne.s32.totalorder %s53, %s54
      %p68 = scmp.eq.s32.totalorder %s25, 1
      %p69 = por %p67, %p68
      %p71 = scmp.ne.s32.totalorder %s54, %s70
      %p72 = scmp.eq.s32.totalorder %s25, 0
      %p73 = por %p71, %p72
      %s74 = ssub.s32 %s19, %s26
      %p75 = scmp.eq.s32.totalorder %s74, 0
      %s77 = sadd.s32 %s76, 1
      %s78 = scalar_select %p75, %s76, %s77
      %p81 = pneg %p75
      %p82 = scmp.eq.s32.totalorder %s19, 1
      %p83 = por %p81, %p82
      %p84 = scmp.ne.s32.totalorder %s76, %s79
      %p85 = scmp.eq.s32.totalorder %s19, 0
      %p86 = por %p84, %p85
      %p87 = scmp.ne.s32.totalorder %s76, %s79
      %p88 = scmp.eq.s32.totalorder %s24, 1
      %p89 = por %p87, %p88
      %p90 = scmp.ne.s32.totalorder %s79, %s80
      %p91 = scmp.eq.s32.totalorder %s24, 0
      %p92 = por %p90, %p91
      %p93 = scmp.ne.s32.totalorder %s79, %s80
      %p94 = scmp.eq.s32.totalorder %s25, 1
      %p95 = por %p93, %p94
      %p97 = scmp.ne.s32.totalorder %s80, %s96
      %p98 = scmp.eq.s32.totalorder %s25, 0
      %p99 = por %p97, %p98
      %s100 = ssub.s32 %s19, %s26
      %p101 = scmp.eq.s32.totalorder %s100, 0
      %s103 = sadd.s32 %s102, 1
      %s104 = scalar_select %p101, %s102, %s103
      %p107 = pneg %p101
      %p108 = scmp.eq.s32.totalorder %s19, 1
      %p109 = por %p107, %p108
      %p110 = scmp.ne.s32.totalorder %s102, %s105
      %p111 = scmp.eq.s32.totalorder %s19, 0
      %p112 = por %p110, %p111
      %p113 = scmp.ne.s32.totalorder %s102, %s105
      %p114 = scmp.eq.s32.totalorder %s24, 1
      %p115 = por %p113, %p114
      %p116 = scmp.ne.s32.totalorder %s105, %s106
      %p117 = scmp.eq.s32.totalorder %s24, 0
      %p118 = por %p116, %p117
      %p119 = scmp.ne.s32.totalorder %s105, %s106
      %p120 = scmp.eq.s32.totalorder %s25, 1
      %p121 = por %p119, %p120
      %p123 = scmp.ne.s32.totalorder %s106, %s122
      %p124 = scmp.eq.s32.totalorder %s25, 0
      %p125 = por %p123, %p124
      %p126 = scmp.le.s32.totalorder 1, %s19
      %p127 = scmp.lt.s32.totalorder %s19, 3
      %p128 = pnand %p126, %p127
      %p129 = pneg %p128
      // Predicated region
      $region9: #{tpu_custom_call.1} parent=5 // pred_check
        _
      $region10: #{tpu_custom_call.1} parent=5 // pred_check_branch
        %131 = sbr.rel (%p128) target = $region12
      $region11: #{tpu_custom_call.1} parent=5 // pred_region
        %s132 = ssub.s32 %s19, 1
        // Predicated region
        $region13: #{tpu_custom_call.1} parent=11 // pred_check
          %p133 = pneg %p40
        $region14: #{tpu_custom_call.1} parent=11 // pred_check_branch
          %135 = sbr.rel (%p133) target = $region16
        $region15: #{tpu_custom_call.1} parent=11 // pred_region
          _
        $region16: #{tpu_custom_call.1} parent=11 // pred_fallthru
          _
      $region12: #{tpu_custom_call.1} parent=5 // pred_fallthru
        _
      %p136 = scmp.lt.s32.totalorder %s19, 2
      // Predicated region
      $region17: #{tpu_custom_call.1} parent=5 // pred_check
        %p137 = pneg %p136
      $region18: #{tpu_custom_call.1} parent=5 // pred_check_branch
        %139 = sbr.rel (%p137) target = $region20
      $region19: #{tpu_custom_call.1} parent=5 // pred_region
        // Predicated region
        $region21: #{tpu_custom_call.1} parent=19 // pred_check
          %p140 = pneg %p60
        $region22: #{tpu_custom_call.1} parent=19 // pred_check_branch
          %142 = sbr.rel (%p140) target = $region24
        $region23: #{tpu_custom_call.1} parent=19 // pred_region
          %s143 = sand.u32 %s50, 1
          %s144 = scalar_lea.sflag [#allocation4], %s143
          %s145 = sand.u32 %s50, 1
          %s146 = smul.addr %s145, 8
          %s147 = scalar_lea.vmem [#allocation3], %s146
          %s149 = ssub.s32 128, 128
          %150 = vsyncadd %s144, %s149
          %s151 = smul.addr %s19, 128
          %s152 = scalar_lea.hbm %s1, %s151
          %s154 = sshll.u32 %s147, 4
          %s155 = int_to_ptr.vmem [resolvable:$true] %s154
          %157 = dma.hbm_to_vmem [thread:$0]  %s152, 128, %s155, %s144
        $region24: #{tpu_custom_call.1} parent=19 // pred_fallthru
          _
        // Predicated region
        $region25: #{tpu_custom_call.1} parent=19 // pred_check
          %p158 = pneg %p86
        $region26: #{tpu_custom_call.1} parent=19 // pred_check_branch
          %160 = sbr.rel (%p158) target = $region28
        $region27: #{tpu_custom_call.1} parent=19 // pred_region
          %s161 = sand.u32 %s76, 1
          %s162 = scalar_lea.sflag [#allocation7], %s161
          %s163 = sand.u32 %s76, 1
          %s164 = smul.addr %s163, 8
          %s165 = scalar_lea.vmem [#allocation6], %s164
          %s167 = ssub.s32 128, 128
          %168 = vsyncadd %s162, %s167
          %s169 = smul.addr %s19, 128
          %s170 = scalar_lea.hbm %s2, %s169
          %s172 = sshll.u32 %s165, 4
          %s173 = int_to_ptr.vmem [resolvable:$true] %s172
          %175 = dma.hbm_to_vmem [thread:$0]  %s170, 128, %s173, %s162
        $region28: #{tpu_custom_call.1} parent=19 // pred_fallthru
          _
      $region20: #{tpu_custom_call.1} parent=5 // pred_fallthru
        _
      %p176 = scmp.le.s32.totalorder 1, %s19
      %p177 = scmp.lt.s32.totalorder %s19, 3
      %p178 = pnand %p176, %p177
      %p179 = pneg %p178
      // Predicated region
      $region29: #{tpu_custom_call.1} parent=5 // pred_check
        _
      $region30: #{tpu_custom_call.1} parent=5 // pred_check_branch
        %181 = sbr.rel (%p178) target = $region32
      $region31: #{tpu_custom_call.1} parent=5 // pred_region
        %s182 = ssub.s32 %s19, 1
        %s183 = sand.u32 %s53, 1
        %s184 = scalar_lea.sflag [#allocation4], %s183
        %s185 = sand.u32 %s53, 1
        %s186 = smul.addr %s185, 8
        %s187 = scalar_lea.vmem [#allocation3], %s186
        // Predicated region
        $region33: #{tpu_custom_call.1} parent=31 // pred_check
          %p188 = pneg %p66
        $region34: #{tpu_custom_call.1} parent=31 // pred_check_branch
          %190 = sbr.rel (%p188) target = $region36
        $region35: #{tpu_custom_call.1} parent=31 // pred_region
          %191 = dma.done %s184, 128
        $region36: #{tpu_custom_call.1} parent=31 // pred_fallthru
          _
        %s192 = sand.u32 %s79, 1
        %s193 = scalar_lea.sflag [#allocation7], %s192
        %s194 = sand.u32 %s79, 1
        %s195 = smul.addr %s194, 8
        %s196 = scalar_lea.vmem [#allocation6], %s195
        // Predicated region
        $region37: #{tpu_custom_call.1} parent=31 // pred_check
          %p197 = pneg %p92
        $region38: #{tpu_custom_call.1} parent=31 // pred_check_branch
          %199 = sbr.rel (%p197) target = $region40
        $region39: #{tpu_custom_call.1} parent=31 // pred_region
          %200 = dma.done %s193, 128
        $region40: #{tpu_custom_call.1} parent=31 // pred_fallthru
          _
        %p201 = pneg %p40
        %p202 = pneg %p37
        %s203 = sand.u32 %s53, 1
        %s204 = scalar_lea.sflag [#allocation4], %s203
        %s205 = sand.u32 %s53, 1
        %s206 = smul.addr %s205, 8
        %s207 = scalar_lea.vmem [#allocation3], %s206
        %p208 = pneg %p66
        %p209 = pneg %p63
        %s210 = sand.u32 %s79, 1
        %s211 = scalar_lea.sflag [#allocation7], %s210
        %s212 = sand.u32 %s79, 1
        %s213 = smul.addr %s212, 8
        %s214 = scalar_lea.vmem [#allocation6], %s213
        %p215 = pneg %p92
        %p216 = pneg %p89
        %p217 = pneg %p118
        %p218 = pneg %p115
        %s219 = sand.u32 %s105, 1
        %s220 = scalar_lea.sflag [#allocation5], %s219
        %s221 = sand.u32 %s105, 1
        %s222 = smul.addr %s221, 8
        %s223 = scalar_lea.vmem [#allocation8], %s222
        %s224 = sld [smem:[#allocation2]]
        %v225 = vld [vmem:[%s187] sm:$0xff]
        %v226 = vld [vmem:[%s196] sm:$0xff]
        %v227 = vstv %s224
        %v228 = vmul.f32 %v227, %v225
        %v229 = vmul.f32 %v228, %v226
        %230 = vst [vmem:[%s223] sm:$0xff] %v229
        %s231 = sand.u32 %s105, 1
        %s232 = scalar_lea.sflag [#allocation5], %s231
        %s233 = sand.u32 %s105, 1
        %s234 = smul.addr %s233, 8
        %s235 = scalar_lea.vmem [#allocation8], %s234
        // Predicated region
        $region41: #{tpu_custom_call.1} parent=31 // pred_check
          %p236 = pneg %p115
        $region42: #{tpu_custom_call.1} parent=31 // pred_check_branch
          %238 = sbr.rel (%p236) target = $region44
        $region43: #{tpu_custom_call.1} parent=31 // pred_region
          %s240 = ssub.s32 128, 128
          %241 = vsyncadd %s232, %s240
          %s242 = smul.addr %s24, 128
          %s243 = scalar_lea.hbm %s3, %s242
          %s245 = sshll.u32 %s235, 4
          %s246 = int_to_ptr.vmem [resolvable:$true] %s245
          %248 = dma.vmem_to_hbm [thread:$0]  %s246, 128, %s243, %s232
        $region44: #{tpu_custom_call.1} parent=31 // pred_fallthru
          _
      $region32: #{tpu_custom_call.1} parent=5 // pred_fallthru
        _
      %p249 = scmp.le.s32.totalorder 2, %s19
      // Predicated region
      $region45: #{tpu_custom_call.1} parent=5 // pred_check
        %p250 = pneg %p249
      $region46: #{tpu_custom_call.1} parent=5 // pred_check_branch
        %252 = sbr.rel (%p250) target = $region48
      $region47: #{tpu_custom_call.1} parent=5 // pred_region
        %s253 = ssub.s32 %s19, 2
        // Predicated region
        $region49: #{tpu_custom_call.1} parent=47 // pred_check
          %p254 = pneg %p121
        $region50: #{tpu_custom_call.1} parent=47 // pred_check_branch
          %256 = sbr.rel (%p254) target = $region52
        $region51: #{tpu_custom_call.1} parent=47 // pred_region
          %s257 = sand.u32 %s106, 1
          %s258 = scalar_lea.sflag [#allocation5], %s257
          %s259 = sand.u32 %s106, 1
          %s260 = smul.addr %s259, 8
          %s261 = scalar_lea.vmem [#allocation8], %s260
          %262 = dma.done %s258, 128
        $region52: #{tpu_custom_call.1} parent=47 // pred_fallthru
          _
      $region48: #{tpu_custom_call.1} parent=5 // pred_fallthru
        _
    $region6: #{tpu_custom_call.1} parent=1 // loop_footer
      %s23 = sadd.s32 1, %s19
    $region7: #{tpu_custom_call.1} parent=1 // loop_footer_branch
      %18 = sbr.rel target = $region3
    $region8: #{tpu_custom_call.1} parent=1 // loop_exit
      _
    %263 = vsyncpa [#allocation4], 1
    %s264 = scalar_lea.sflag [#allocation4], 1
    %265 = vsyncpa %s264, 1
    %266 = vsyncpa [#allocation7], 1
    %s267 = scalar_lea.sflag [#allocation7], 1
    %268 = vsyncpa %s267, 1
    %269 = vsyncpa [#allocation5], 1
    %s270 = scalar_lea.sflag [#allocation5], 1
    %271 = vsyncpa %s270, 1

</llo_original>
